<compile_context>
chip_gen: v7x
topology: tpu7x:2x2x1
jax: 0.10.0
libtpu: 0.0.40
codegen_flags: <defaults>
</compile_context>

<pallas_src>
import math
from functools import partial

import numpy as np
import jax
import jax.numpy as jnp
from jax.experimental import pallas as pl
from jax.experimental.pallas import tpu as pltpu


NEG_SLOPE = 0.01          # torch.nn.LeakyReLU default
_SPLIT_MIN_ROWS = 256     # split into >=2 tiles above this (v7x megacore)


# --------------------------------------------------------------------------- #
# helpers
# --------------------------------------------------------------------------- #
def _round_up(v, m):
    return -(-int(v) // m) * m


def _lane_pad(n):
    return _round_up(n, 128)


def _estimate_row_bytes(in_feat, out_dims):
    """Rough per-row VMEM cost: double-buffered x / out tiles + lane-padded
    intermediate activations."""
    dbl = 2 * 4 * (_lane_pad(in_feat) + _lane_pad(out_dims[-1]))
    acts = 4 * (_lane_pad(in_feat) + sum(_lane_pad(d) for d in out_dims))
    return dbl + acts


def _pick_tile_rows(rows, row_bytes, tb_cap, vmem_budget):
    """Pick the per-step row-tile: as big as the VMEM budget allows, multiple
    of 8 when tiling, and >=2 grid steps once there is enough work so both
    v7x TensorCores participate."""
    align = 8
    cap = min(int(tb_cap), max(align, vmem_budget // max(row_bytes, 1)))
    cap = max(align, (cap // align) * align)
    if rows > cap:
        return cap
    if rows >= _SPLIT_MIN_ROWS and rows >= 2 * align:
        return min(cap, _round_up(pl.cdiv(rows, 2), align))
    return rows            # single full-extent tile (always a legal block)


# --------------------------------------------------------------------------- #
# kernel
# --------------------------------------------------------------------------- #
def _mlp_encoder_kernel(n_layers, out_dims, x_ref, *refs):
    """Fused MLP: (Linear -> LeakyReLU)*(n-1) -> Linear -> Sigmoid.

    refs = (w_0, ..., w_{n-1}, bias_stack, out_ref)
      w_i        : (in_i, out_i)  VMEM, resident across grid steps
      bias_stack : (n_layers, pad) VMEM, resident; row i holds bias_i (padded)
      x_ref      : (TB, in_feat)   double-buffered batch tile
      out_ref    : (TB, out_feat)  double-buffered batch tile
    """
    out_ref = refs[-1]
    b_ref = refs[n_layers]

    h = x_ref[...]
    for i in range(n_layers):
        w = refs[i][...]
        z = jnp.dot(h, w, preferred_element_type=jnp.float32)
        # Per-layer bias read straight from the ref: (1, out_i) broadcast.
        z = z + b_ref[pl.ds(i, 1), pl.ds(0, out_dims[i])]
        if i < n_layers - 1:
            h = jnp.where(z > 0, z, NEG_SLOPE * z)      # LeakyReLU
        else:
            h = 0.5 * jnp.tanh(0.5 * z) + 0.5           # sigmoid (single EUP tanh)
    out_ref[...] = h.astype(out_ref.dtype)


# --------------------------------------------------------------------------- #
# parameter preparation (one-time, host side)
# --------------------------------------------------------------------------- #
def prepare_encoder_params(weights, biases, *, pack='auto',
                           max_packed_weight_bytes=8 * 1024 * 1024):
    """One-time repack of the encoder parameters for the Pallas kernel.

    Builds (a) the plain (in_i, out_i) weights + padded bias stack and,
    when profitable, (b) a lane-dense variant: rows are grouped `pack` at a
    time, each weight becomes a block-diagonal (pack*in_i, pack*out_i)
    matrix and each bias is tiled `pack` times, so every matmul / store in
    the kernel is full-lane (no masked partial stores, no 16x padded out
    buffer, no in-kernel relayout needed).
    """
    ws = [np.asarray(w, np.float32) for w in weights]
    bs = [np.asarray(b, np.float32) for b in biases]
    in_dim = ws[0].shape[0]
    out_dim = ws[-1].shape[1]
    out_dims = tuple(int(w.shape[1]) for w in ws)

    def _bias_stack(blist, dims):
        pad = max(128, _lane_pad(max(dims)))
        stack = np.zeros((len(blist), pad), np.float32)
        for i, b in enumerate(blist):
            stack[i, : b.shape[0]] = b
        return jnp.asarray(stack)

    params = {
        'in_dim': in_dim,
        'out_dim': out_dim,
        'pack': 1,
        'plain': {
            'weights': tuple(jnp.asarray(w) for w in ws),
            'bias_stack': _bias_stack(bs, out_dims),
            'out_dims': out_dims,
            'in_feat': in_dim,
            'out_feat': out_dim,
        },
    }

    if pack == 'auto':
        pack = 128 // math.gcd(out_dim, 128) if out_dim % 128 != 0 else 1
    if pack > 1:
        bd_bytes = 4 * pack * pack * sum(w.shape[0] * w.shape[1] for w in ws)
        if bd_bytes <= max_packed_weight_bytes:
            bd_ws, bd_bs, bd_dims = [], [], []
            for w, b in zip(ws, bs):
                fi, fo = w.shape
                bd = np.zeros((pack * fi, pack * fo), np.float32)
                for j in range(pack):
                    bd[j * fi:(j + 1) * fi, j * fo:(j + 1) * fo] = w
                bd_ws.append(jnp.asarray(bd))
                bd_bs.append(np.tile(b, pack))
                bd_dims.append(pack * fo)
            params['pack'] = pack
            params['packed'] = {
                'weights': tuple(bd_ws),
                'bias_stack': _bias_stack(bd_bs, bd_dims),
                'out_dims': tuple(bd_dims),
                'in_feat': pack * in_dim,
                'out_feat': pack * out_dim,
            }
    return params


# --------------------------------------------------------------------------- #
# forward
# --------------------------------------------------------------------------- #
def action_encoder_forward(x, params, *, tb_max=8192,
                           vmem_budget_bytes=24 * 1024 * 1024):
    """ActionEncoder.forward for phase='ACTION', ff=True (encoder path only)."""
    batch, in_dim = x.shape
    assert in_dim == params['in_dim'], "input feature dim mismatch"

    pack = params['pack']
    use_packed = pack > 1 and 'packed' in params and batch % pack == 0
    p = params['packed'] if use_packed else params['plain']
    eff_pack = pack if use_packed else 1

    rows = batch // eff_pack
    in_feat, out_feat = p['in_feat'], p['out_feat']
    out_dims = p['out_dims']
    weights, bias_stack = p['weights'], p['bias_stack']

    # Free (contiguous, row-major) regroup of the batch; no extra HBM pass.
    x_eff = x if eff_pack == 1 else x.reshape(rows, in_feat)

    # VMEM budget: subtract resident weights/biases (possibly double-buffered).
    resident = 2 * 4 * (sum(w.shape[0] * _lane_pad(w.shape[1]) for w in weights)
                        + bias_stack.shape[0] * bias_stack.shape[1])
    budget = max(1 << 20, vmem_budget_bytes - resident)
    row_bytes = _estimate_row_bytes(in_feat, out_dims)
    tb_cap = max(1, tb_max // eff_pack)
    tb = _pick_tile_rows(rows, row_bytes, tb_cap, budget)
    grid = (pl.cdiv(rows, tb),)

    kernel = partial(_mlp_encoder_kernel, len(weights), out_dims)
    in_specs = ([pl.BlockSpec((tb, in_feat), lambda i: (i, 0))]
                + [pl.BlockSpec(tuple(w.shape), lambda i: (0, 0)) for w in weights]
                + [pl.BlockSpec(tuple(bias_stack.shape), lambda i: (0, 0))])
    out_spec = pl.BlockSpec((tb, out_feat), lambda i: (i, 0))

    out = pl.pallas_call(
        kernel,
        out_shape=jax.ShapeDtypeStruct((rows, out_feat), jnp.float32),
        grid=grid,
        in_specs=in_specs,
        out_specs=out_spec,
        compiler_params=pltpu.CompilerParams(
            dimension_semantics=("parallel",),        # v7x: shard batch over 2 TCs
            vmem_limit_bytes=64 * 1024 * 1024),
    )(x_eff, *weights, bias_stack)

    if eff_pack == 1:
        return out
    return out.reshape(batch, params['out_dim'])      # free metadata reshape


# --------------------------------------------------------------------------- #
# module-consistent parameter construction (mirrors ActionEncoder.__init__)
# --------------------------------------------------------------------------- #
def build_action_encoder_params(sizes, key, ff=True):
    """Reproduce the size bookkeeping of ActionEncoder.__init__ and build
    deterministic kaiming-uniform-style parameters for the encoder stack."""
    sizes = {k: list(v) for k, v in sizes.items()}
    if ff:
        sizes['encoder'][-1] = sizes['action'][-1]
        sizes['action'][0] = sizes['encoder'][-1]
    if 'decoder' in sizes:
        sizes['decoder'][0] = sizes['encoder'][-1]
        sizes['decoder'][-1] = sizes['encoder'][0]
    else:
        sizes['decoder'] = list(reversed(sizes['encoder']))
    sizes['action'][0] = sizes['encoder'][-1]
    sizes['decoder'][0] = sizes['encoder'][-1]

    enc_sizes = sizes['encoder']
    weights, biases = [], []
    for i in range(len(enc_sizes) - 1):
        fan_in, fan_out = enc_sizes[i], enc_sizes[i + 1]
        key, kw, kb = jax.random.split(key, 3)
        # kaiming_uniform_(mode='fan_in', nonlinearity='leaky_relu', a=0):
        #   bound = sqrt(2) * sqrt(3 / fan_in); bias: nn.Linear default.
        w_bound = math.sqrt(2.0) * math.sqrt(3.0 / fan_in)
        b_bound = 1.0 / math.sqrt(fan_in)
        # stored as (in, out) — transpose of torch's (out, in)
        w = jax.random.uniform(kw, (fan_in, fan_out), jnp.float32, -w_bound, w_bound)
        b = jax.random.uniform(kb, (fan_out,), jnp.float32, -b_bound, b_bound)
        weights.append(w)
        biases.append(b)
    return sizes, weights, biases


def _reference(x, weights, biases):
    h = x
    for i, (w, b) in enumerate(zip(weights, biases)):
        z = h @ w + b
        h = jnp.where(z > 0, z, NEG_SLOPE * z) if i < len(weights) - 1 \
            else jax.nn.sigmoid(z)
    return h


# --------------------------------------------------------------------------- #
# demo / self-test
# --------------------------------------------------------------------------- #
if __name__ == "__main__":
    sizes = {'encoder': [32, 64, 16], 'action': [16, 8]}
    key = jax.random.PRNGKey(0)
    key, k1, k2, k3 = jax.random.split(key, 4)

    sizes, enc_w, enc_b = build_action_encoder_params(sizes, key, ff=True)
    # After __init__ bookkeeping (ff=True): encoder = [32, 64, 8]
    in_dim, out_dim = sizes['encoder'][0], sizes['encoder'][-1]

    # One-time parameter prep (block-diagonal lane-dense repack, pack=16).
    params = prepare_encoder_params(enc_w, enc_b)

    # Case 1: tiny batch -> plain path, single full-extent tile.
    x1 = jax.random.normal(k1, (8, in_dim), jnp.float32)
    out1 = action_encoder_forward(x1, params)
    jax.block_until_ready(out1)
    assert out1.shape == (8, out_dim)
    assert jnp.allclose(out1, _reference(x1, enc_w, enc_b), atol=1e-4), \
        "mismatch vs reference (case 1)"

    # Case 2: batch % 16 == 0 -> lane-dense packed path, 2 grid steps
    # (resident block-diagonal weights, unmasked 128-lane stores).
    x2 = jax.random.normal(k2, (256, in_dim), jnp.float32)
    out2 = action_encoder_forward(x2, params, tb_max=128)
    jax.block_until_ready(out2)
    assert out2.shape == (256, out_dim)
    assert jnp.allclose(out2, _reference(x2, enc_w, enc_b), atol=1e-4), \
        "mismatch vs reference (case 2)"

    # Case 3: batch not divisible by 16 -> plain fallback, 3 tiles with a
    # masked partial last tile.
    x3 = jax.random.normal(k3, (40, in_dim), jnp.float32)
    out3 = action_encoder_forward(x3, params, tb_max=16)
    jax.block_until_ready(out3)
    assert out3.shape == (40, out_dim)
    assert jnp.allclose(out3, _reference(x3, enc_w, enc_b), atol=1e-4), \
        "mismatch vs reference (case 3)"

    # TODO(synk): phases 'GENERATE'/'BOTH' (decoder / concat paths) and the
    # discarded `action` head do not affect the returned tensor for the
    # default phase='ACTION', ff=True and are not implemented here.
    print("KERNEL_OK")
</pallas_src>

<mosaic_0001>
module attributes {stable_mosaic.version = 11 : i64} {
  func.func @_mlp_encoder_kernel(%arg0: i32, %arg1: memref<8x32xf32, #tpu.memory_space<vmem>>, %arg2: memref<32x64xf32, #tpu.memory_space<vmem>>, %arg3: memref<64x8xf32, #tpu.memory_space<vmem>>, %arg4: memref<2x128xf32, #tpu.memory_space<vmem>>, %arg5: memref<8x8xf32, #tpu.memory_space<vmem>>) attributes {dimension_semantics = [#tpu.dimension_semantics<parallel>], iteration_bounds = array<i64: 1>, scalar_prefetch = 0 : i64, scratch_operands = 0 : i64, tpu.core_type = #tpu.core_type<tc>, window_params = [{transform_indices = @transform_0, window_bounds = array<i64: 8, 32>}, {pipeline_mode = #tpu.pipeline_mode<synchronous>, transform_indices = @transform_1, window_bounds = array<i64: 32, 64>}, {pipeline_mode = #tpu.pipeline_mode<synchronous>, transform_indices = @transform_2, window_bounds = array<i64: 64, 8>}, {pipeline_mode = #tpu.pipeline_mode<synchronous>, transform_indices = @transform_3, window_bounds = array<i64: 2, 128>}, {transform_indices = @transform_4, window_bounds = array<i64: 8, 8>}]} {
    %c0 = arith.constant 0 : index
    %c0_0 = arith.constant 0 : index
    %0 = vector.load %arg1[%c0, %c0_0] : memref<8x32xf32, #tpu.memory_space<vmem>>, vector<8x32xf32>
    %c0_1 = arith.constant 0 : index
    %c0_2 = arith.constant 0 : index
    %1 = vector.load %arg2[%c0_1, %c0_2] : memref<32x64xf32, #tpu.memory_space<vmem>>, vector<32x64xf32>
    %cst = arith.constant dense<0.000000e+00> : vector<8x64xf32>
    %2 = tpu.matmul %0, %1, %cst {dimension_numbers = #tpu.dot_dimension_numbers<[1], [0], [0], [1], [0, 0, 1, 1], [], []>} : vector<8x32xf32>, vector<32x64xf32>, vector<8x64xf32> -> vector<8x64xf32>
    %c0_3 = arith.constant 0 : index
    %c0_4 = arith.constant 0 : index
    %3 = vector.load %arg4[%c0_3, %c0_4] : memref<2x128xf32, #tpu.memory_space<vmem>>, vector<1x64xf32>
    %4 = vector.broadcast %3 : vector<1x64xf32> to vector<8x64xf32>
    %5 = arith.addf %2, %4 : vector<8x64xf32>
    %cst_5 = arith.constant 0.000000e+00 : f32
    %6 = vector.broadcast %cst_5 : f32 to vector<8x64xf32>
    %7 = arith.cmpf ogt, %5, %6 : vector<8x64xf32>
    %cst_6 = arith.constant 0.00999999977 : f32
    %8 = vector.broadcast %cst_6 : f32 to vector<8x64xf32>
    %9 = arith.mulf %8, %5 : vector<8x64xf32>
    %10 = arith.select %7, %5, %9 : vector<8x64xi1>, vector<8x64xf32>
    %c0_7 = arith.constant 0 : index
    %c0_8 = arith.constant 0 : index
    %11 = vector.load %arg3[%c0_7, %c0_8] : memref<64x8xf32, #tpu.memory_space<vmem>>, vector<64x8xf32>
    %cst_9 = arith.constant dense<0.000000e+00> : vector<8x8xf32>
    %12 = tpu.matmul %10, %11, %cst_9 {dimension_numbers = #tpu.dot_dimension_numbers<[1], [0], [0], [1], [0, 0, 1, 1], [], []>} : vector<8x64xf32>, vector<64x8xf32>, vector<8x8xf32> -> vector<8x8xf32>
    %c1 = arith.constant 1 : index
    %c0_10 = arith.constant 0 : index
    %13 = vector.load %arg4[%c1, %c0_10] : memref<2x128xf32, #tpu.memory_space<vmem>>, vector<1x8xf32>
    %14 = vector.broadcast %13 : vector<1x8xf32> to vector<8x8xf32>
    %15 = arith.addf %12, %14 : vector<8x8xf32>
    %cst_11 = arith.constant 5.000000e-01 : f32
    %16 = vector.broadcast %cst_11 : f32 to vector<8x8xf32>
    %17 = arith.mulf %16, %15 : vector<8x8xf32>
    %18 = math.tanh %17 : vector<8x8xf32>
    %cst_12 = arith.constant 5.000000e-01 : f32
    %19 = vector.broadcast %cst_12 : f32 to vector<8x8xf32>
    %20 = arith.mulf %19, %18 : vector<8x8xf32>
    %cst_13 = arith.constant 5.000000e-01 : f32
    %21 = vector.broadcast %cst_13 : f32 to vector<8x8xf32>
    %22 = arith.addf %20, %21 : vector<8x8xf32>
    %c0_14 = arith.constant 0 : index
    %c0_15 = arith.constant 0 : index
    %23 = vector.load %arg5[%c0_14, %c0_15] : memref<8x8xf32, #tpu.memory_space<vmem>>, vector<8x8xf32>
    tpu.vector_store %arg5[%c0_14, %c0_15], %22 {strides = array<i32>} : memref<8x8xf32, #tpu.memory_space<vmem>>, vector<8x8xf32>,
    return
  }
  func.func @transform_0(%arg0: i32) -> (i32, i32) {
    %c0_i32 = arith.constant 0 : i32
    %c0_i32_0 = arith.constant 0 : i32
    return %arg0, %c0_i32 : i32, i32
  }
  func.func @transform_1(%arg0: i32) -> (i32, i32) {
    %c0_i32 = arith.constant 0 : i32
    %c0_i32_0 = arith.constant 0 : i32
    %c0_i32_1 = arith.constant 0 : i32
    return %c0_i32, %c0_i32_0 : i32, i32
  }
  func.func @transform_2(%arg0: i32) -> (i32, i32) {
    %c0_i32 = arith.constant 0 : i32
    %c0_i32_0 = arith.constant 0 : i32
    %c0_i32_1 = arith.constant 0 : i32
    return %c0_i32, %c0_i32_0 : i32, i32
  }
  func.func @transform_3(%arg0: i32) -> (i32, i32) {
    %c0_i32 = arith.constant 0 : i32
    %c0_i32_0 = arith.constant 0 : i32
    %c0_i32_1 = arith.constant 0 : i32
    return %c0_i32, %c0_i32_0 : i32, i32
  }
  func.func @transform_4(%arg0: i32) -> (i32, i32) {
    %c0_i32 = arith.constant 0 : i32
    %c0_i32_0 = arith.constant 0 : i32
    return %arg0, %c0_i32 : i32, i32
  }
}

</mosaic_0001>

<llo_original>
// kernel: tpu_custom_call.1
$region0: #{tpu_custom_call.1}
  #allocation0 [shape = 'u32[]', space=smem, size = 0x4, offset = 0x4, fixed_abs, tag = 'smem constant byte address 0x4 - core index']
  #allocation1 [shape = 'u32[144,128]{1,0:T(1,128)}', space=vmem, size = 0x12000, scoped, tag = 'internal scratch']
  %s0 = inlined_call_operand.hbm [shape: f32[8,32], index: 0, kind: input, shape index: {}]
  %s1 = inlined_call_operand.hbm [shape: f32[32,64], index: 1, kind: input, shape index: {}]
  %s2 = inlined_call_operand.hbm [shape: f32[64,8], index: 2, kind: input, shape index: {}]
  %s3 = inlined_call_operand.hbm [shape: f32[2,128], index: 3, kind: input, shape index: {}]
  %s4 = inlined_call_operand.hbm [shape: f32[8,8], index: 4, kind: output, shape index: {}]
  %s5 = sld [smem:[#allocation0]]
  $region42: #{tpu_custom_call.1} parent=0
    _
  %s7 = ssub.s32 1, %s5
  %s8 = scalar_select 0, %s7, %s5
  $region1: #{tpu_custom_call.1} parent=0
    #allocation2 [shape = 'u8[4096]{0}', space=vmem, size = 0x1000, scoped, tag = 'input window, operand 0, single buffered']
    #allocation3 [shape = 's32[1]{0}', space=sflag, size = 0x4, scoped, tag = 'scoped memory for tpu_custom_call.1']
    #allocation4 [shape = 's32[1]{0}', space=sflag, size = 0x4, scoped, tag = 'scoped memory for tpu_custom_call.1']
    #allocation5 [shape = 'u8[16384]{0}', space=vmem, size = 0x4000, scoped, tag = 'input window, operand 1, single buffered']
    #allocation6 [shape = 's32[1]{0}', space=sflag, size = 0x4, scoped, tag = 'scoped memory for tpu_custom_call.1']
    #allocation7 [shape = 'u8[32768]{0}', space=vmem, size = 0x8000, scoped, tag = 'input window, operand 2, single buffered']
    #allocation8 [shape = 'u8[1024]{0}', space=vmem, size = 0x400, scoped, tag = 'input window, operand 3, single buffered']
    #allocation9 [shape = 's32[1]{0}', space=sflag, size = 0x4, scoped, tag = 'scoped memory for tpu_custom_call.1']
    #allocation10 [shape = 'u8[4096]{0}', space=vmem, size = 0x1000, scoped, tag = 'output window, operand 0, single buffered']
    %9 = vsyncpa [#allocation3], 0
    %10 = vsyncpa [#allocation6], 0
    %11 = vsyncpa [#allocation9], 0
    %12 = vsyncpa [#allocation4], 0
    // Predicated region
    $region2: #{tpu_custom_call.1} parent=1 // pred_check
      _
    $region3: #{tpu_custom_call.1} parent=1 // pred_check_branch
      %14 = sbr.rel (0) target = $region5
    $region4: #{tpu_custom_call.1} parent=1 // pred_region
      %s16 = ssub.s32 128, 128
      %17 = vsyncadd [#allocation3], %s16
      %s19 = sshll.u32 [#allocation2], 4
      %s20 = int_to_ptr.vmem [resolvable:$true] %s19
      %22 = dma.hbm_to_vmem [thread:$0]  %s0, 128, %s20, [#allocation3]
    $region5: #{tpu_custom_call.1} parent=1 // pred_fallthru
      _
    // Predicated region
    $region6: #{tpu_custom_call.1} parent=1 // pred_check
      _
    $region7: #{tpu_custom_call.1} parent=1 // pred_check_branch
      %24 = sbr.rel (0) target = $region9
    $region8: #{tpu_custom_call.1} parent=1 // pred_region
      %s26 = ssub.s32 512, 512
      %27 = vsyncadd [#allocation6], %s26
      %s28 = sshll.u32 [#allocation5], 4
      %s29 = int_to_ptr.vmem [resolvable:$true] %s28
      %34 = dma.hbm_to_vmem [thread:$0]  %s1, 512, %s29, [#allocation6], 128, 128, 8
    $region9: #{tpu_custom_call.1} parent=1 // pred_fallthru
      _
    // Predicated region
    $region10: #{tpu_custom_call.1} parent=1 // pred_check
      _
    $region11: #{tpu_custom_call.1} parent=1 // pred_check_branch
      %36 = sbr.rel (0) target = $region13
    $region12: #{tpu_custom_call.1} parent=1 // pred_region
      %s38 = ssub.s32 1024, 1024
      %39 = vsyncadd [#allocation6], %s38
      %s40 = sshll.u32 [#allocation7], 4
      %s41 = int_to_ptr.vmem [resolvable:$true] %s40
      %46 = dma.hbm_to_vmem [thread:$0]  %s2, 1024, %s41, [#allocation6], 128, 128, 8
    $region13: #{tpu_custom_call.1} parent=1 // pred_fallthru
      _
    // Predicated region
    $region14: #{tpu_custom_call.1} parent=1 // pred_check
      _
    $region15: #{tpu_custom_call.1} parent=1 // pred_check_branch
      %48 = sbr.rel (0) target = $region17
    $region16: #{tpu_custom_call.1} parent=1 // pred_region
      %s50 = ssub.s32 32, 32
      %51 = vsyncadd [#allocation9], %s50
      %s53 = sshll.u32 [#allocation8], 4
      %s54 = int_to_ptr.vmem [resolvable:$true] %s53
      %56 = dma.hbm_to_vmem [thread:$0]  %s3, 32, %s54, [#allocation9]
    $region17: #{tpu_custom_call.1} parent=1 // pred_fallthru
      _
    // Predicated region
    $region18: #{tpu_custom_call.1} parent=1 // pred_check
      _
    $region19: #{tpu_custom_call.1} parent=1 // pred_check_branch
      %58 = sbr.rel (0) target = $region21
    $region20: #{tpu_custom_call.1} parent=1 // pred_region
      %59 = dma.done [#allocation3], 128
    $region21: #{tpu_custom_call.1} parent=1 // pred_fallthru
      _
    // Predicated region
    $region22: #{tpu_custom_call.1} parent=1 // pred_check
      _
    $region23: #{tpu_custom_call.1} parent=1 // pred_check_branch
      %61 = sbr.rel (0) target = $region25
    $region24: #{tpu_custom_call.1} parent=1 // pred_region
      %62 = dma.done [#allocation6], 512
    $region25: #{tpu_custom_call.1} parent=1 // pred_fallthru
      _
    // Predicated region
    $region26: #{tpu_custom_call.1} parent=1 // pred_check
      _
    $region27: #{tpu_custom_call.1} parent=1 // pred_check_branch
      %64 = sbr.rel (0) target = $region29
    $region28: #{tpu_custom_call.1} parent=1 // pred_region
      %65 = dma.done [#allocation6], 1024
    $region29: #{tpu_custom_call.1} parent=1 // pred_fallthru
      _
    // Predicated region
    $region30: #{tpu_custom_call.1} parent=1 // pred_check
      _
    $region31: #{tpu_custom_call.1} parent=1 // pred_check_branch
      %67 = sbr.rel (0) target = $region33
    $region32: #{tpu_custom_call.1} parent=1 // pred_region
      %68 = dma.done [#allocation9], 32
    $region33: #{tpu_custom_call.1} parent=1 // pred_fallthru
      _
    %v69 = vld [vmem:[#allocation2] sm:$0xff]
    %v70 = vld [vmem:[#allocation5] sm:$0xff]
    %v71 = vld [vmem:[#allocation5 + $0x8] sm:$0xff]
    %v72 = vld [vmem:[#allocation5 + $0x10] sm:$0xff]
    %v73 = vld [vmem:[#allocation5 + $0x18] sm:$0xff]
    %v74 = vld [vmem:[#allocation8] sm:$0x1]
    %v75 = vlaneseq
    %v76 = vshrl.u32 %v75, 7
    %v77 = vsub.s32 0, %v76
    %v78 = vrot.slane %v74, %v77
    %vm79 = vcmask 261120
    %v81 = vsel %vm79, %v69, 0
    %83 = vmatprep.subr.mxu0 0.0
    %84 = vmatpush1.msra.mxu0 %v70
    %85 = vmatprep.subr.mxu0 0.0
    %86 = vmatpush1.msra.mxu0 %v71
    %87 = vmatprep.subr.mxu0 0.0
    %88 = vmatpush1.msra.mxu0 %v72
    %89 = vmatprep.subr.mxu0 0.0
    %90 = vmatpush1.msra.mxu0 %v73
    %91 = vmatprep.subr.mxu0 0.0
    %92 = vmatpush1.msra.mxu0 0.0
    %93 = vmatprep.subr.mxu0 0.0
    %94 = vmatpush1.msra.mxu0 0.0
    %95 = vmatprep.subr.mxu0 0.0
    %96 = vmatpush1.msra.mxu0 0.0
    %97 = vmatprep.subr.mxu0 0.0
    %98 = vmatpush1.msra.mxu0 0.0
    %99 = vmatprep.subr.mxu0 0.0
    %100 = vmatpush1.msra.mxu0 0.0
    %101 = vmatprep.subr.mxu0 0.0
    %102 = vmatpush1.msra.mxu0 0.0
    %103 = vmatprep.subr.mxu0 0.0
    %104 = vmatpush1.msra.mxu0 0.0
    %105 = vmatprep.subr.mxu0 0.0
    %106 = vmatpush1.msra.mxu0 0.0
    %107 = vmatprep.subr.mxu0 0.0
    %108 = vmatpush1.msra.mxu0 0.0
    %109 = vmatprep.subr.mxu0 0.0
    %110 = vmatpush1.msra.mxu0 0.0
    %111 = vmatprep.subr.mxu0 0.0
    %112 = vmatpush1.msra.mxu0 0.0
    %113 = vmatprep.subr.mxu0 0.0
    %114 = vmatpush1.msra.mxu0 0.0
    %115 = vmatprep.subr.mxu0 0.0
    %116 = vmatpush1.msra.mxu0 0.0
    %117 = vmatprep.subr.mxu0 0.0
    %118 = vmatpush1.msra.mxu0 0.0
    %119 = vmatprep.subr.mxu0 0.0
    %120 = vmatpush1.msra.mxu0 0.0
    %121 = vmatprep.subr.mxu0 0.0
    %122 = vmatpush1.msra.mxu0 0.0
    %123 = vmatprep.subr.mxu0 0.0
    %124 = vmatpush1.msra.mxu0 0.0
    %125 = vmatprep.subr.mxu0 0.0
    %126 = vmatpush1.msra.mxu0 0.0
    %127 = vmatprep.subr.mxu0 0.0
    %128 = vmatpush1.msra.mxu0 0.0
    %129 = vmatprep.subr.mxu0 0.0
    %130 = vmatpush1.msra.mxu0 0.0
    %131 = vmatprep.subr.mxu0 0.0
    %132 = vmatpush1.msra.mxu0 0.0
    %133 = vmatprep.subr.mxu0 0.0
    %134 = vmatpush1.msra.mxu0 0.0
    %135 = vmatprep.subr.mxu0 0.0
    %136 = vmatpush1.msra.mxu0 0.0
    %137 = vmatprep.subr.mxu0 0.0
    %138 = vmatpush1.msra.mxu0 0.0
    %139 = vmatprep.subr.mxu0 0.0
    %140 = vmatpush1.msra.mxu0 0.0
    %141 = vmatprep.subr.mxu0 0.0
    %142 = vmatpush1.msra.mxu0 0.0
    %143 = vmatprep.subr.mxu0 0.0
    %144 = vmatpush1.msra.mxu0 0.0
    %145 = vmatprep.subr.mxu0 0.0
    %146 = vmatpush1.msra.mxu0 0.0
    %147 = vmatprep.mubr.f32.mxu0 0.0
    %148 = vmatmul.mubr.f32.gmra.mrb[0].mxu0 %v81
    %v149 = vpop.f32.mrb[0].mxu0
    %v150 = vadd.f32 %v78, %v149
    %v151 = vpop.f32.mrb[0].mxu0
    %152 = vdwg.mxu0
    %vm153 = vcmp.gt.f32.partialorder %v150, 0.0
    %v154 = vmul.f32 %v150, 0.01
    %v155 = vsel %vm153, %v150, %v154
    %v156 = vld [vmem:[#allocation7] sm:$0xff]
    %v157 = vld [vmem:[#allocation7 + $0x8] sm:$0xff]
    %v158 = vld [vmem:[#allocation7 + $0x10] sm:$0xff]
    %v159 = vld [vmem:[#allocation7 + $0x18] sm:$0xff]
    %v160 = vld [vmem:[#allocation7 + $0x20] sm:$0xff]
    %v161 = vld [vmem:[#allocation7 + $0x28] sm:$0xff]
    %v162 = vld [vmem:[#allocation7 + $0x30] sm:$0xff]
    %v163 = vld [vmem:[#allocation7 + $0x38] sm:$0xff]
    %v164 = vld [vmem:[#allocation8 + $0x1] sm:$0x1]
    %v165 = vlaneseq
    %v166 = vshrl.u32 %v165, 7
    %v167 = vsub.s32 0, %v166
    %v168 = vrot.slane %v164, %v167
    %vm169 = vcmask 523264
    %v171 = vsel %vm169, %v155, 0
    %173 = vmatprep.subr.mxu0 0.0
    %174 = vmatpush1.msra.mxu0 %v156
    %175 = vmatprep.subr.mxu0 0.0
    %176 = vmatpush1.msra.mxu0 %v157
    %177 = vmatprep.subr.mxu0 0.0
    %178 = vmatpush1.msra.mxu0 %v158
    %179 = vmatprep.subr.mxu0 0.0
    %180 = vmatpush1.msra.mxu0 %v159
    %181 = vmatprep.subr.mxu0 0.0
    %182 = vmatpush1.msra.mxu0 %v160
    %183 = vmatprep.subr.mxu0 0.0
    %184 = vmatpush1.msra.mxu0 %v161
    %185 = vmatprep.subr.mxu0 0.0
    %186 = vmatpush1.msra.mxu0 %v162
    %187 = vmatprep.subr.mxu0 0.0
    %188 = vmatpush1.msra.mxu0 %v163
    %189 = vmatprep.subr.mxu0 0.0
    %190 = vmatpush1.msra.mxu0 0.0
    %191 = vmatprep.subr.mxu0 0.0
    %192 = vmatpush1.msra.mxu0 0.0
    %193 = vmatprep.subr.mxu0 0.0
    %194 = vmatpush1.msra.mxu0 0.0
    %195 = vmatprep.subr.mxu0 0.0
    %196 = vmatpush1.msra.mxu0 0.0
    %197 = vmatprep.subr.mxu0 0.0
    %198 = vmatpush1.msra.mxu0 0.0
    %199 = vmatprep.subr.mxu0 0.0
    %200 = vmatpush1.msra.mxu0 0.0
    %201 = vmatprep.subr.mxu0 0.0
    %202 = vmatpush1.msra.mxu0 0.0
    %203 = vmatprep.subr.mxu0 0.0
    %204 = vmatpush1.msra.mxu0 0.0
    %205 = vmatprep.subr.mxu0 0.0
    %206 = vmatpush1.msra.mxu0 0.0
    %207 = vmatprep.subr.mxu0 0.0
    %208 = vmatpush1.msra.mxu0 0.0
    %209 = vmatprep.subr.mxu0 0.0
    %210 = vmatpush1.msra.mxu0 0.0
    %211 = vmatprep.subr.mxu0 0.0
    %212 = vmatpush1.msra.mxu0 0.0
    %213 = vmatprep.subr.mxu0 0.0
    %214 = vmatpush1.msra.mxu0 0.0
    %215 = vmatprep.subr.mxu0 0.0
    %216 = vmatpush1.msra.mxu0 0.0
    %217 = vmatprep.subr.mxu0 0.0
    %218 = vmatpush1.msra.mxu0 0.0
    %219 = vmatprep.subr.mxu0 0.0
    %220 = vmatpush1.msra.mxu0 0.0
    %221 = vmatprep.subr.mxu0 0.0
    %222 = vmatpush1.msra.mxu0 0.0
    %223 = vmatprep.subr.mxu0 0.0
    %224 = vmatpush1.msra.mxu0 0.0
    %225 = vmatprep.subr.mxu0 0.0
    %226 = vmatpush1.msra.mxu0 0.0
    %227 = vmatprep.subr.mxu0 0.0
    %228 = vmatpush1.msra.mxu0 0.0
    %229 = vmatprep.subr.mxu0 0.0
    %230 = vmatpush1.msra.mxu0 0.0
    %231 = vmatprep.subr.mxu0 0.0
    %232 = vmatpush1.msra.mxu0 0.0
    %233 = vmatprep.subr.mxu0 0.0
    %234 = vmatpush1.msra.mxu0 0.0
    %235 = vmatprep.subr.mxu0 0.0
    %236 = vmatpush1.msra.mxu0 0.0
    %237 = vmatprep.mubr.f32.mxu0 0.0
    %238 = vmatmul.mubr.f32.gmra.mrb[0].mxu0 %v171
    %v239 = vpop.f32.mrb[0].mxu0
    %v240 = vadd.f32 %v168, %v239
    %v241 = vpop.f32.mrb[0].mxu0
    %242 = vdwg.mxu0
    %v243 = vmul.f32 %v240, 0.5
    %v244 = vtanh.pop %v243
    %v245 = vmul.f32 %v244, 0.5
    %v246 = vadd.f32 %v245, 0.5
    %vm247 = vcmask 64512
    %248 = vst.msk [vmem:[#allocation10] sm:$0xff] %vm247, %v246
    // Predicated region
    $region34: #{tpu_custom_call.1} parent=1 // pred_check
      _
    $region35: #{tpu_custom_call.1} parent=1 // pred_check_branch
      %250 = sbr.rel (0) target = $region37
    $region36: #{tpu_custom_call.1} parent=1 // pred_region
      %s252 = ssub.s32 128, 128
      %253 = vsyncadd [#allocation4], %s252
      %s255 = sshll.u32 [#allocation10], 4
      %s256 = int_to_ptr.vmem [resolvable:$true] %s255
      %258 = dma.vmem_to_hbm [thread:$0]  %s256, 128, %s4, [#allocation4]
    $region37: #{tpu_custom_call.1} parent=1 // pred_fallthru
      _
    // Predicated region
    $region38: #{tpu_custom_call.1} parent=1 // pred_check
      _
    $region39: #{tpu_custom_call.1} parent=1 // pred_check_branch
      %260 = sbr.rel (0) target = $region41
    $region40: #{tpu_custom_call.1} parent=1 // pred_region
      %261 = dma.done [#allocation4], 128
    $region41: #{tpu_custom_call.1} parent=1 // pred_fallthru
      _
    %262 = vsyncpa [#allocation3], 1
    %263 = vsyncpa [#allocation6], 1
    %264 = vsyncpa [#allocation9], 1
    %265 = vsyncpa [#allocation4], 1

</llo_original>
